<compile_context>
chip_gen: v5e
topology: v5e:2x2
jax: 0.10.0
libtpu: 0.0.40
codegen_flags: <defaults>
</compile_context>

<pallas_src>
from functools import partial

import numpy as np
import jax
import jax.numpy as jnp
from jax import lax
from jax.experimental import pallas as pl
from jax.experimental.pallas import tpu as pltpu


def _round_up(x: int, m: int) -> int:
    return ((x + m - 1) // m) * m


def _pick_block_rows(n: int, requested, max_block_rows: int) -> int:
    if requested is None:
        # Aim for at least 2 blocks so the "parallel" axis can shard across
        # both TensorCores on v7x, while staying under the VMEM-safe cap.
        tb = (n + 1) // 2
    else:
        tb = int(requested)
    tb = max(16, min(_round_up(tb, 16), max_block_rows))  # 16: bf16 sublane tile safe
    return tb


def _task_losses_partial_kernel(ids_ref,          # VMEM (TB, 2) int32: [:,0]=task id, [:,1]=class id
                                p0_ref, t0_ref,   # VMEM (TB, D): regression preds / targets
                                p1_ref,           # VMEM (TB, C): classification logits
                                out_ref,          # VMEM (1, 1, 128) f32 per-block partial sums
                                *, n_rows):
    tb = ids_ref.shape[0]

    ids = ids_ref[...]                                       # (TB, 2) int32
    tid = ids[:, 0:1]                                        # (TB, 1)
    cls = ids[:, 1:2]                                        # (TB, 1)

    # Ragged-tail handling: the last block may read unspecified padding past the
    # end of the arrays; mask those rows out in-register (no jnp.pad copies).
    row = pl.program_id(0) * tb + lax.broadcasted_iota(jnp.int32, (tb, 1), 0)
    valid = row < n_rows                                     # (TB, 1) bool

    m0 = jnp.logical_and(tid == 0, valid)                    # task-0 rows
    m1 = jnp.logical_and(tid == 1, valid)                    # task-1 rows

    # ---- task 0: masked sum of squared errors (MSE numerator) ----
    d = p0_ref[...].astype(jnp.float32) - t0_ref[...].astype(jnp.float32)
    sq_row = jnp.sum(d * d, axis=-1, keepdims=True)          # (TB, 1)
    s_sq = jnp.sum(jnp.where(m0, sq_row, 0.0))
    s_n0 = jnp.sum(jnp.where(m0, 1.0, 0.0))                  # #task-0 rows in block

    # ---- task 1: masked sum of per-sample NLL (CE numerator) ----
    logits = p1_ref[...].astype(jnp.float32)                 # (TB, C)
    mx = jnp.max(logits, axis=-1, keepdims=True)
    lse = mx + jnp.log(jnp.sum(jnp.exp(logits - mx), axis=-1, keepdims=True))
    lane_c = lax.broadcasted_iota(jnp.int32, logits.shape, 1)
    tgt_logit = jnp.sum(jnp.where(lane_c == cls, logits, 0.0),
                        axis=-1, keepdims=True)              # gather via compare+select (no MXU)
    nll = lse - tgt_logit                                    # (TB, 1)
    s_nll = jnp.sum(jnp.where(m1, nll, 0.0))
    s_n1 = jnp.sum(jnp.where(m1, 1.0, 0.0))                  # #task-1 rows in block

    # ---- emit lane-dense partials: lanes 0..3 of a single (1, 128) row ----
    lane = lax.broadcasted_iota(jnp.int32, (1, 128), 1)
    out_ref[0] = jnp.where(lane == 0, s_sq,
                 jnp.where(lane == 1, s_n0,
                 jnp.where(lane == 2, s_nll,
                 jnp.where(lane == 3, s_n1, 0.0))))


def task_losses(weights, task_ids, preds0, tgt0_full, preds1, tgt1_cls,
                *, block_rows=None, max_block_rows=4096):
    """Weighted multi-task loss (MSE for task 0, CrossEntropy for task 1).

    task_ids: (N,), preds0/tgt0_full: (N, D), preds1: (N, C),
    tgt1_cls: (N,) class indices, all scattered to full-batch row positions.

    NOTE: if a task has zero selected samples the corresponding mean divides by
    zero and yields NaN — this intentionally matches PyTorch's mean over an
    empty boolean selection.
    """
    n, d = preds0.shape
    _, c = preds1.shape

    tb = _pick_block_rows(n, block_rows, max_block_rows)
    num_blocks = pl.cdiv(n, tb)

    # Single narrow int stream: col 0 = task id, col 1 = class id.
    ids = jnp.stack([task_ids.astype(jnp.int32), tgt1_cls.astype(jnp.int32)], axis=1)

    # VMEM estimate: each input stream pads its last dim to a 128-lane tile
    # (512 B/row for f32/i32) and is double-buffered by the pipeline.
    vmem_est = tb * 128 * 4 * 4 * 2 + 2 * (1 * 128 * 4) + (1 << 20)
    cp = dict(dimension_semantics=("parallel",))              # independent blocks -> megacore
    if vmem_est > 32 * 1024 * 1024:
        cp["vmem_limit_bytes"] = min(int(vmem_est * 5 // 4), 112 * 1024 * 1024)

    partials = pl.pallas_call(
        partial(_task_losses_partial_kernel, n_rows=n),
        out_shape=jax.ShapeDtypeStruct((num_blocks, 1, 128), jnp.float32),
        grid=(num_blocks,),
        in_specs=[
            pl.BlockSpec((tb, 2), lambda i: (i, 0)),   # task ids + class ids
            pl.BlockSpec((tb, d), lambda i: (i, 0)),   # regression preds
            pl.BlockSpec((tb, d), lambda i: (i, 0)),   # regression targets
            pl.BlockSpec((tb, c), lambda i: (i, 0)),   # classification logits
        ],
        out_specs=pl.BlockSpec((1, 1, 128), lambda i: (i, 0, 0)),
        compiler_params=pltpu.CompilerParams(**cp),
    )(ids, preds0, tgt0_full, preds1)

    # Finalize in plain JAX: two divides + weighted sum on 4 numbers.
    sums = jnp.sum(partials[:, 0, :4], axis=0)                # [s_sq, n0, s_nll, n1]
    mse = sums[0] / (sums[1] * d)                             # mean over n0 * D elements
    ce = sums[2] / sums[3]                                    # mean over n1 samples
    if weights is None:
        w = jnp.ones((2,), jnp.float32)
    else:
        w = weights.astype(jnp.float32)
    return w[0] * mse + w[1] * ce


if __name__ == "__main__":
    N, D, C = 250, 32, 16   # N not a multiple of the block -> exercises in-kernel tail masking

    key = jax.random.PRNGKey(0)
    k0, k1, k2, k3, k4 = jax.random.split(key, 5)

    task_ids = jax.random.randint(k4, (N,), 0, 2, dtype=jnp.int32)
    preds0 = jax.random.normal(k0, (N, D), dtype=jnp.float32)       # regression preds
    preds1 = jax.random.normal(k1, (N, C), dtype=jnp.float32)       # classification logits
    tgt0_full = jax.random.normal(k2, (N, D), dtype=jnp.float32)    # regression targets (scattered)
    tgt1_cls = jax.random.randint(k3, (N,), 0, C, dtype=jnp.int32)  # class targets (scattered)
    weights = jnp.array([0.3, 0.7], dtype=jnp.float32)

    loss = jax.block_until_ready(
        task_losses(weights, task_ids, preds0, tgt0_full, preds1, tgt1_cls))

    # ---- pure numpy reference mirroring the PyTorch module exactly ----
    p0 = np.asarray(preds0, dtype=np.float64)
    t0 = np.asarray(tgt0_full, dtype=np.float64)
    p1 = np.asarray(preds1, dtype=np.float64)
    t1 = np.asarray(tgt1_cls)
    tid = np.asarray(task_ids)
    sel0 = tid == 0
    sel1 = tid == 1
    mse_ref = np.mean((p0[sel0] - t0[sel0]) ** 2)                   # MSELoss(mean)
    lg = p1[sel1]
    lse = np.log(np.sum(np.exp(lg - lg.max(-1, keepdims=True)), -1)) + lg.max(-1)
    ce_ref = np.mean(lse - lg[np.arange(lg.shape[0]), t1[sel1]])    # CrossEntropyLoss(mean)
    loss_ref = 0.3 * mse_ref + 0.7 * ce_ref

    assert np.allclose(float(loss), loss_ref, rtol=1e-4, atol=1e-5), (float(loss), loss_ref)
    print("KERNEL_OK")
</pallas_src>

<mosaic_0001>
module attributes {stable_mosaic.version = 11 : i64} {
  func.func @_task_losses_partial_kernel(%arg0: i32, %arg1: memref<128x2xi32, #tpu.memory_space<vmem>>, %arg2: memref<128x32xf32, #tpu.memory_space<vmem>>, %arg3: memref<128x32xf32, #tpu.memory_space<vmem>>, %arg4: memref<128x16xf32, #tpu.memory_space<vmem>>, %arg5: memref<1x1x128xf32, #tpu.memory_space<vmem>>) attributes {dimension_semantics = [#tpu.dimension_semantics<parallel>], iteration_bounds = array<i64: 2>, scalar_prefetch = 0 : i64, scratch_operands = 0 : i64, tpu.core_type = #tpu.core_type<tc>, window_params = [{transform_indices = @transform_0, window_bounds = array<i64: 128, 2>}, {transform_indices = @transform_1, window_bounds = array<i64: 128, 32>}, {transform_indices = @transform_2, window_bounds = array<i64: 128, 32>}, {transform_indices = @transform_3, window_bounds = array<i64: 128, 16>}, {transform_indices = @transform_4, window_bounds = array<i64: 1, 1, 128>}]} {
    %c0 = arith.constant 0 : index
    %c0_0 = arith.constant 0 : index
    %0 = vector.load %arg1[%c0, %c0_0] : memref<128x2xi32, #tpu.memory_space<vmem>>, vector<128x2xi32>
    %1 = vector.extract_strided_slice %0 {offsets = [0, 0], sizes = [128, 1], strides = [1, 1]} : vector<128x2xi32> to vector<128x1xi32>
    %2 = vector.extract_strided_slice %0 {offsets = [0, 1], sizes = [128, 1], strides = [1, 1]} : vector<128x2xi32> to vector<128x1xi32>
    %c128_i32 = arith.constant 128 : i32
    %3 = arith.muli %arg0, %c128_i32 : i32
    %4 = tpu.iota {dimensions = array<i32: 0>} : vector<128x1xi32>
    %5 = vector.broadcast %3 : i32 to vector<128x1xi32>
    %6 = arith.addi %5, %4 : vector<128x1xi32>
    %c250_i32 = arith.constant 250 : i32
    %7 = vector.broadcast %c250_i32 : i32 to vector<128x1xi32>
    %8 = arith.cmpi slt, %6, %7 : vector<128x1xi32>
    %c0_i32 = arith.constant 0 : i32
    %9 = vector.broadcast %c0_i32 : i32 to vector<128x1xi32>
    %10 = arith.cmpi eq, %1, %9 : vector<128x1xi32>
    %11 = arith.andi %10, %8 : vector<128x1xi1>
    %c1_i32 = arith.constant 1 : i32
    %12 = vector.broadcast %c1_i32 : i32 to vector<128x1xi32>
    %13 = arith.cmpi eq, %1, %12 : vector<128x1xi32>
    %14 = arith.andi %13, %8 : vector<128x1xi1>
    %c0_1 = arith.constant 0 : index
    %c0_2 = arith.constant 0 : index
    %15 = vector.load %arg2[%c0_1, %c0_2] : memref<128x32xf32, #tpu.memory_space<vmem>>, vector<128x32xf32>
    %c0_3 = arith.constant 0 : index
    %c0_4 = arith.constant 0 : index
    %16 = vector.load %arg3[%c0_3, %c0_4] : memref<128x32xf32, #tpu.memory_space<vmem>>, vector<128x32xf32>
    %17 = arith.subf %15, %16 : vector<128x32xf32>
    %18 = arith.mulf %17, %17 : vector<128x32xf32>
    %cst = arith.constant dense<0.000000e+00> : vector<128xf32>
    %19 = vector.multi_reduction <add>, %18, %cst [1] : vector<128x32xf32> to vector<128xf32>
    %20 = vector.shape_cast %19 : vector<128xf32> to vector<128x1xf32>
    %cst_5 = arith.constant 0.000000e+00 : f32
    %21 = vector.broadcast %cst_5 : f32 to vector<128x1xf32>
    %22 = arith.select %11, %20, %21 : vector<128x1xi1>, vector<128x1xf32>
    %23 = vector.shape_cast %22 : vector<128x1xf32> to vector<1x128x1xf32>
    %cst_6 = arith.constant dense<0.000000e+00> : vector<1xf32>
    %24 = vector.multi_reduction <add>, %23, %cst_6 [1, 2] : vector<1x128x1xf32> to vector<1xf32>
    %25 = vector.shape_cast %24 : vector<1xf32> to vector<1x1x1xf32>
    %26 = vector.extract %25[0, 0, 0] : f32 from vector<1x1x1xf32>
    %cst_7 = arith.constant 1.000000e+00 : f32
    %cst_8 = arith.constant 0.000000e+00 : f32
    %27 = vector.broadcast %cst_7 : f32 to vector<128x1xf32>
    %28 = vector.broadcast %cst_8 : f32 to vector<128x1xf32>
    %29 = arith.select %11, %27, %28 : vector<128x1xi1>, vector<128x1xf32>
    %30 = vector.shape_cast %29 : vector<128x1xf32> to vector<1x128x1xf32>
    %cst_9 = arith.constant dense<0.000000e+00> : vector<1xf32>
    %31 = vector.multi_reduction <add>, %30, %cst_9 [1, 2] : vector<1x128x1xf32> to vector<1xf32>
    %32 = vector.shape_cast %31 : vector<1xf32> to vector<1x1x1xf32>
    %33 = vector.extract %32[0, 0, 0] : f32 from vector<1x1x1xf32>
    %c0_10 = arith.constant 0 : index
    %c0_11 = arith.constant 0 : index
    %34 = vector.load %arg4[%c0_10, %c0_11] : memref<128x16xf32, #tpu.memory_space<vmem>>, vector<128x16xf32>
    %cst_12 = arith.constant dense<0xFF800000> : vector<128xf32>
    %35 = vector.multi_reduction <maximumf>, %34, %cst_12 [1] : vector<128x16xf32> to vector<128xf32>
    %36 = vector.shape_cast %35 : vector<128xf32> to vector<128x1xf32>
    %37 = vector.broadcast %36 : vector<128x1xf32> to vector<128x16xf32>
    %38 = arith.subf %34, %37 : vector<128x16xf32>
    %39 = math.exp %38 : vector<128x16xf32>
    %cst_13 = arith.constant dense<0.000000e+00> : vector<128xf32>
    %40 = vector.multi_reduction <add>, %39, %cst_13 [1] : vector<128x16xf32> to vector<128xf32>
    %41 = vector.shape_cast %40 : vector<128xf32> to vector<128x1xf32>
    %42 = math.log %41 : vector<128x1xf32>
    %43 = arith.addf %36, %42 : vector<128x1xf32>
    %44 = tpu.iota {dimensions = array<i32: 1>} : vector<128x16xi32>
    %45 = vector.broadcast %2 : vector<128x1xi32> to vector<128x16xi32>
    %46 = arith.cmpi eq, %44, %45 : vector<128x16xi32>
    %cst_14 = arith.constant 0.000000e+00 : f32
    %47 = vector.broadcast %cst_14 : f32 to vector<128x16xf32>
    %48 = arith.select %46, %34, %47 : vector<128x16xi1>, vector<128x16xf32>
    %cst_15 = arith.constant dense<0.000000e+00> : vector<128xf32>
    %49 = vector.multi_reduction <add>, %48, %cst_15 [1] : vector<128x16xf32> to vector<128xf32>
    %50 = vector.shape_cast %49 : vector<128xf32> to vector<128x1xf32>
    %51 = arith.subf %43, %50 : vector<128x1xf32>
    %cst_16 = arith.constant 0.000000e+00 : f32
    %52 = vector.broadcast %cst_16 : f32 to vector<128x1xf32>
    %53 = arith.select %14, %51, %52 : vector<128x1xi1>, vector<128x1xf32>
    %54 = vector.shape_cast %53 : vector<128x1xf32> to vector<1x128x1xf32>
    %cst_17 = arith.constant dense<0.000000e+00> : vector<1xf32>
    %55 = vector.multi_reduction <add>, %54, %cst_17 [1, 2] : vector<1x128x1xf32> to vector<1xf32>
    %56 = vector.shape_cast %55 : vector<1xf32> to vector<1x1x1xf32>
    %57 = vector.extract %56[0, 0, 0] : f32 from vector<1x1x1xf32>
    %cst_18 = arith.constant 1.000000e+00 : f32
    %cst_19 = arith.constant 0.000000e+00 : f32
    %58 = vector.broadcast %cst_18 : f32 to vector<128x1xf32>
    %59 = vector.broadcast %cst_19 : f32 to vector<128x1xf32>
    %60 = arith.select %14, %58, %59 : vector<128x1xi1>, vector<128x1xf32>
    %61 = vector.shape_cast %60 : vector<128x1xf32> to vector<1x128x1xf32>
    %cst_20 = arith.constant dense<0.000000e+00> : vector<1xf32>
    %62 = vector.multi_reduction <add>, %61, %cst_20 [1, 2] : vector<1x128x1xf32> to vector<1xf32>
    %63 = vector.shape_cast %62 : vector<1xf32> to vector<1x1x1xf32>
    %64 = vector.extract %63[0, 0, 0] : f32 from vector<1x1x1xf32>
    %65 = tpu.iota {dimensions = array<i32: 1>} : vector<1x128xi32>
    %c0_i32_21 = arith.constant 0 : i32
    %66 = vector.broadcast %c0_i32_21 : i32 to vector<1x128xi32>
    %67 = arith.cmpi eq, %65, %66 : vector<1x128xi32>
    %c1_i32_22 = arith.constant 1 : i32
    %68 = vector.broadcast %c1_i32_22 : i32 to vector<1x128xi32>
    %69 = arith.cmpi eq, %65, %68 : vector<1x128xi32>
    %c2_i32 = arith.constant 2 : i32
    %70 = vector.broadcast %c2_i32 : i32 to vector<1x128xi32>
    %71 = arith.cmpi eq, %65, %70 : vector<1x128xi32>
    %c3_i32 = arith.constant 3 : i32
    %72 = vector.broadcast %c3_i32 : i32 to vector<1x128xi32>
    %73 = arith.cmpi eq, %65, %72 : vector<1x128xi32>
    %cst_23 = arith.constant 0.000000e+00 : f32
    %74 = vector.broadcast %64 : f32 to vector<1x128xf32>
    %75 = vector.broadcast %cst_23 : f32 to vector<1x128xf32>
    %76 = arith.select %73, %74, %75 : vector<1x128xi1>, vector<1x128xf32>
    %77 = vector.broadcast %57 : f32 to vector<1x128xf32>
    %78 = arith.select %71, %77, %76 : vector<1x128xi1>, vector<1x128xf32>
    %79 = vector.broadcast %33 : f32 to vector<1x128xf32>
    %80 = arith.select %69, %79, %78 : vector<1x128xi1>, vector<1x128xf32>
    %81 = vector.broadcast %26 : f32 to vector<1x128xf32>
    %82 = arith.select %67, %81, %80 : vector<1x128xi1>, vector<1x128xf32>
    %c0_24 = arith.constant 0 : index
    %c0_25 = arith.constant 0 : index
    %c0_26 = arith.constant 0 : index
    %83 = vector.load %arg5[%c0_24, %c0_25, %c0_26] : memref<1x1x128xf32, #tpu.memory_space<vmem>>, vector<1x1x128xf32>
    %84 = vector.shape_cast %83 : vector<1x1x128xf32> to vector<1x128xf32>
    %85 = vector.shape_cast %82 : vector<1x128xf32> to vector<1x1x128xf32>
    tpu.vector_store %arg5[%c0_24, %c0_25, %c0_26], %85 {strides = array<i32>} : memref<1x1x128xf32, #tpu.memory_space<vmem>>, vector<1x1x128xf32>,
    return
  }
  func.func @transform_0(%arg0: i32) -> (i32, i32) {
    %c0_i32 = arith.constant 0 : i32
    %c0_i32_0 = arith.constant 0 : i32
    return %arg0, %c0_i32 : i32, i32
  }
  func.func @transform_1(%arg0: i32) -> (i32, i32) {
    %c0_i32 = arith.constant 0 : i32
    %c0_i32_0 = arith.constant 0 : i32
    return %arg0, %c0_i32 : i32, i32
  }
  func.func @transform_2(%arg0: i32) -> (i32, i32) {
    %c0_i32 = arith.constant 0 : i32
    %c0_i32_0 = arith.constant 0 : i32
    return %arg0, %c0_i32 : i32, i32
  }
  func.func @transform_3(%arg0: i32) -> (i32, i32) {
    %c0_i32 = arith.constant 0 : i32
    %c0_i32_0 = arith.constant 0 : i32
    return %arg0, %c0_i32 : i32, i32
  }
  func.func @transform_4(%arg0: i32) -> (i32, i32, i32) {
    %c0_i32 = arith.constant 0 : i32
    %c0_i32_0 = arith.constant 0 : i32
    %c0_i32_1 = arith.constant 0 : i32
    return %arg0, %c0_i32, %c0_i32_0 : i32, i32, i32
  }
}

</mosaic_0001>

<llo_original>
// kernel: tpu_custom_call.1
$region0: #{tpu_custom_call.1}
  #allocation0 [shape = 'u32[]', space=smem, size = 0x4, offset = 0x4, fixed_abs, tag = 'smem constant byte address 0x4 - core index']
  #allocation1 [shape = 'u32[72,128]{1,0:T(1,128)}', space=vmem, size = 0x9000, scoped, tag = 'internal scratch']
  %s0 = inlined_call_operand.vmem [shape: s32[250,2], index: 0, kind: input, shape index: {}]
  %s1 = inlined_call_operand.vmem [shape: f32[250,32], index: 1, kind: input, shape index: {}]
  %s2 = inlined_call_operand.vmem [shape: f32[250,32], index: 2, kind: input, shape index: {}]
  %s3 = inlined_call_operand.vmem [shape: f32[250,16], index: 3, kind: input, shape index: {}]
  %s4 = inlined_call_operand.hbm [shape: f32[2,1,128], index: 4, kind: output, shape index: {}]
  %s5 = sld [smem:[#allocation0]]
  $region49: #{tpu_custom_call.1} parent=0
    _
  %s7 = ssub.s32 1, %s5
  %s8 = scalar_select 0, %s7, %s5
  $region1: #{tpu_custom_call.1} parent=0
    #allocation2 [shape = 'u8[1024]{0}', space=vmem, size = 0x400, scoped, tag = 'output window, operand 0']
    #allocation3 [shape = 's32[2]{0}', space=sflag, size = 0x8, scoped, tag = 'scoped memory for tpu_custom_call.1']
    %9 = vsyncpa [#allocation3], 0
    %s10 = scalar_lea.sflag [#allocation3], 1
    %11 = vsyncpa %s10, 0
    loop: start=0, step=1, limit=4
    $region2: #{tpu_custom_call.1} parent=1 // loop_pre_header
      _
    $region3: #{tpu_custom_call.1} parent=1 // loop_header
      %s13 = sphi 0, %s17
      %p14 = scmp.ge.s32.totalorder %s13, 4
      %s23 = sphi 0, %s25
      %s26 = sphi 0, %s23
      %s27 = sphi 0, %s26
      %s43 = sphi 0, %s27
      %s49 = sphi 0, %s51
      %s52 = sphi 0, %s49
      %s53 = sphi 0, %s52
      %s69 = sphi 0, %s53
      %s75 = sphi 0, %s77
      %s78 = sphi 0, %s75
      %s79 = sphi 0, %s78
      %s95 = sphi 0, %s79
      %s101 = sphi 0, %s103
      %s104 = sphi 0, %s101
      %s105 = sphi 0, %s104
      %s121 = sphi 0, %s105
      %s127 = sphi 0, %s129
      %s130 = sphi 0, %s127
      %s131 = sphi 0, %s130
      %s147 = sphi 0, %s131
    $region4: #{tpu_custom_call.1} parent=1 // loop_header_branch
      %16 = sbr.rel (%p14) target = $region8
    $region5: #{tpu_custom_call.1} parent=1 // loop_body
      %s18 = ssub.s32 %s13, 1
      %s19 = ssub.s32 %s13, 2
      %s20 = sadd.s32 %s13, 1
      %s21 = ssub.s32 %s13, %s20
      %p22 = scmp.eq.s32.totalorder %s21, 0
      %s24 = sadd.s32 %s23, 1
      %s25 = scalar_select %p22, %s23, %s24
      %p28 = pneg %p22
      %p29 = scmp.eq.s32.totalorder %s13, 1
      %p30 = por %p28, %p29
      %p31 = scmp.ne.s32.totalorder %s23, %s26
      %p32 = scmp.eq.s32.totalorder %s13, 0
      %p33 = por %p31, %p32
      %p34 = scmp.ne.s32.totalorder %s23, %s26
      %p35 = scmp.eq.s32.totalorder %s18, 1
      %p36 = por %p34, %p35
      %p37 = scmp.ne.s32.totalorder %s26, %s27
      %p38 = scmp.eq.s32.totalorder %s18, 0
      %p39 = por %p37, %p38
      %p40 = scmp.ne.s32.totalorder %s26, %s27
      %p41 = scmp.eq.s32.totalorder %s19, 1
      %p42 = por %p40, %p41
      %p44 = scmp.ne.s32.totalorder %s27, %s43
      %p45 = scmp.eq.s32.totalorder %s19, 0
      %p46 = por %p44, %p45
      %s47 = ssub.s32 %s13, %s20
      %p48 = scmp.eq.s32.totalorder %s47, 0
      %s50 = sadd.s32 %s49, 1
      %s51 = scalar_select %p48, %s49, %s50
      %p54 = pneg %p48
      %p55 = scmp.eq.s32.totalorder %s13, 1
      %p56 = por %p54, %p55
      %p57 = scmp.ne.s32.totalorder %s49, %s52
      %p58 = scmp.eq.s32.totalorder %s13, 0
      %p59 = por %p57, %p58
      %p60 = scmp.ne.s32.totalorder %s49, %s52
      %p61 = scmp.eq.s32.totalorder %s18, 1
      %p62 = por %p60, %p61
      %p63 = scmp.ne.s32.totalorder %s52, %s53
      %p64 = scmp.eq.s32.totalorder %s18, 0
      %p65 = por %p63, %p64
      %p66 = scmp.ne.s32.totalorder %s52, %s53
      %p67 = scmp.eq.s32.totalorder %s19, 1
      %p68 = por %p66, %p67
      %p70 = scmp.ne.s32.totalorder %s53, %s69
      %p71 = scmp.eq.s32.totalorder %s19, 0
      %p72 = por %p70, %p71
      %s73 = ssub.s32 %s13, %s20
      %p74 = scmp.eq.s32.totalorder %s73, 0
      %s76 = sadd.s32 %s75, 1
      %s77 = scalar_select %p74, %s75, %s76
      %p80 = pneg %p74
      %p81 = scmp.eq.s32.totalorder %s13, 1
      %p82 = por %p80, %p81
      %p83 = scmp.ne.s32.totalorder %s75, %s78
      %p84 = scmp.eq.s32.totalorder %s13, 0
      %p85 = por %p83, %p84
      %p86 = scmp.ne.s32.totalorder %s75, %s78
      %p87 = scmp.eq.s32.totalorder %s18, 1
      %p88 = por %p86, %p87
      %p89 = scmp.ne.s32.totalorder %s78, %s79
      %p90 = scmp.eq.s32.totalorder %s18, 0
      %p91 = por %p89, %p90
      %p92 = scmp.ne.s32.totalorder %s78, %s79
      %p93 = scmp.eq.s32.totalorder %s19, 1
      %p94 = por %p92, %p93
      %p96 = scmp.ne.s32.totalorder %s79, %s95
      %p97 = scmp.eq.s32.totalorder %s19, 0
      %p98 = por %p96, %p97
      %s99 = ssub.s32 %s13, %s20
      %p100 = scmp.eq.s32.totalorder %s99, 0
      %s102 = sadd.s32 %s101, 1
      %s103 = scalar_select %p100, %s101, %s102
      %p106 = pneg %p100
      %p107 = scmp.eq.s32.totalorder %s13, 1
      %p108 = por %p106, %p107
      %p109 = scmp.ne.s32.totalorder %s101, %s104
      %p110 = scmp.eq.s32.totalorder %s13, 0
      %p111 = por %p109, %p110
      %p112 = scmp.ne.s32.totalorder %s101, %s104
      %p113 = scmp.eq.s32.totalorder %s18, 1
      %p114 = por %p112, %p113
      %p115 = scmp.ne.s32.totalorder %s104, %s105
      %p116 = scmp.eq.s32.totalorder %s18, 0
      %p117 = por %p115, %p116
      %p118 = scmp.ne.s32.totalorder %s104, %s105
      %p119 = scmp.eq.s32.totalorder %s19, 1
      %p120 = por %p118, %p119
      %p122 = scmp.ne.s32.totalorder %s105, %s121
      %p123 = scmp.eq.s32.totalorder %s19, 0
      %p124 = por %p122, %p123
      %s125 = ssub.s32 %s13, %s20
      %p126 = scmp.eq.s32.totalorder %s125, 0
      %s128 = sadd.s32 %s127, 1
      %s129 = scalar_select %p126, %s127, %s128
      %p132 = pneg %p126
      %p133 = scmp.eq.s32.totalorder %s13, 1
      %p134 = por %p132, %p133
      %p135 = scmp.ne.s32.totalorder %s127, %s130
      %p136 = scmp.eq.s32.totalorder %s13, 0
      %p137 = por %p135, %p136
      %p138 = scmp.ne.s32.totalorder %s127, %s130
      %p139 = scmp.eq.s32.totalorder %s18, 1
      %p140 = por %p138, %p139
      %p141 = scmp.ne.s32.totalorder %s130, %s131
      %p142 = scmp.eq.s32.totalorder %s18, 0
      %p143 = por %p141, %p142
      %p144 = scmp.ne.s32.totalorder %s130, %s131
      %p145 = scmp.eq.s32.totalorder %s19, 1
      %p146 = por %p144, %p145
      %p148 = scmp.ne.s32.totalorder %s131, %s147
      %p149 = scmp.eq.s32.totalorder %s19, 0
      %p150 = por %p148, %p149
      %p151 = scmp.le.s32.totalorder 1, %s13
      %p152 = scmp.lt.s32.totalorder %s13, 3
      %p153 = pnand %p151, %p152
      %p154 = pneg %p153
      // Predicated region
      $region9: #{tpu_custom_call.1} parent=5 // pred_check
        _
      $region10: #{tpu_custom_call.1} parent=5 // pred_check_branch
        %156 = sbr.rel (%p153) target = $region12
      $region11: #{tpu_custom_call.1} parent=5 // pred_region
        %s157 = ssub.s32 %s13, 1
      $region12: #{tpu_custom_call.1} parent=5 // pred_fallthru
        _
      %p158 = scmp.lt.s32.totalorder %s13, 2
      // Predicated region
      $region13: #{tpu_custom_call.1} parent=5 // pred_check
        %p159 = pneg %p158
      $region14: #{tpu_custom_call.1} parent=5 // pred_check_branch
        %161 = sbr.rel (%p159) target = $region16
      $region15: #{tpu_custom_call.1} parent=5 // pred_region
        // Predicated region
        $region17: #{tpu_custom_call.1} parent=15 // pred_check
          %p162 = pneg %p33
        $region18: #{tpu_custom_call.1} parent=15 // pred_check_branch
          %164 = sbr.rel (%p162) target = $region20
        $region19: #{tpu_custom_call.1} parent=15 // pred_region
          %s165 = smul.u32 16, %s13
          %p166 = scmp.lt.s32.totalorder %s165, 31
          %s167 = scalar_select %p166, %s165, 31
          %s168 = smul.addr %s167, 8
          %s169 = scalar_lea.vmem %s0, %s168
          %s170 = smul.u32 16, %s13
        $region20: #{tpu_custom_call.1} parent=15 // pred_fallthru
          _
        // Predicated region
        $region21: #{tpu_custom_call.1} parent=15 // pred_check
          %p171 = pneg %p59
        $region22: #{tpu_custom_call.1} parent=15 // pred_check_branch
          %173 = sbr.rel (%p171) target = $region24
        $region23: #{tpu_custom_call.1} parent=15 // pred_region
          %s174 = smul.u32 16, %s13
          %p175 = scmp.lt.s32.totalorder %s174, 31
          %s176 = scalar_select %p175, %s174, 31
          %s177 = smul.addr %s176, 8
          %s178 = scalar_lea.vmem %s1, %s177
          %s179 = smul.u32 16, %s13
        $region24: #{tpu_custom_call.1} parent=15 // pred_fallthru
          _
        // Predicated region
        $region25: #{tpu_custom_call.1} parent=15 // pred_check
          %p180 = pneg %p85
        $region26: #{tpu_custom_call.1} parent=15 // pred_check_branch
          %182 = sbr.rel (%p180) target = $region28
        $region27: #{tpu_custom_call.1} parent=15 // pred_region
          %s183 = smul.u32 16, %s13
          %p184 = scmp.lt.s32.totalorder %s183, 31
          %s185 = scalar_select %p184, %s183, 31
          %s186 = smul.addr %s185, 8
          %s187 = scalar_lea.vmem %s2, %s186
          %s188 = smul.u32 16, %s13
        $region28: #{tpu_custom_call.1} parent=15 // pred_fallthru
          _
        // Predicated region
        $region29: #{tpu_custom_call.1} parent=15 // pred_check
          %p189 = pneg %p111
        $region30: #{tpu_custom_call.1} parent=15 // pred_check_branch
          %191 = sbr.rel (%p189) target = $region32
        $region31: #{tpu_custom_call.1} parent=15 // pred_region
          %s192 = smul.u32 16, %s13
          %p193 = scmp.lt.s32.totalorder %s192, 31
          %s194 = scalar_select %p193, %s192, 31
          %s195 = smul.addr %s194, 8
          %s196 = scalar_lea.vmem %s3, %s195
          %s197 = smul.u32 16, %s13
        $region32: #{tpu_custom_call.1} parent=15 // pred_fallthru
          _
      $region16: #{tpu_custom_call.1} parent=5 // pred_fallthru
        _
      %p198 = scmp.le.s32.totalorder 1, %s13
      %p199 = scmp.lt.s32.totalorder %s13, 3
      %p200 = pnand %p198, %p199
      %p201 = pneg %p200
      // Predicated region
      $region33: #{tpu_custom_call.1} parent=5 // pred_check
        _
      $region34: #{tpu_custom_call.1} parent=5 // pred_check_branch
        %203 = sbr.rel (%p200) target = $region36
      $region35: #{tpu_custom_call.1} parent=5 // pred_region
        %s204 = ssub.s32 %s13, 1
        %s205 = smul.u32 16, %s18
        %p206 = scmp.lt.s32.totalorder %s205, 31
        %s207 = scalar_select %p206, %s205, 31
        %s208 = smul.addr %s207, 8
        %s209 = scalar_lea.vmem %s0, %s208
        %p210 = pneg %p39
        %p211 = pneg %p36
        %s212 = smul.u32 16, %s18
        %p213 = scmp.lt.s32.totalorder %s212, 31
        %s214 = scalar_select %p213, %s212, 31
        %s215 = smul.addr %s214, 8
        %s216 = scalar_lea.vmem %s1, %s215
        %p217 = pneg %p65
        %p218 = pneg %p62
        %s219 = smul.u32 16, %s18
        %p220 = scmp.lt.s32.totalorder %s219, 31
        %s221 = scalar_select %p220, %s219, 31
        %s222 = smul.addr %s221, 8
        %s223 = scalar_lea.vmem %s2, %s222
        %p224 = pneg %p91
        %p225 = pneg %p88
        %s226 = smul.u32 16, %s18
        %p227 = scmp.lt.s32.totalorder %s226, 31
        %s228 = scalar_select %p227, %s226, 31
        %s229 = smul.addr %s228, 8
        %s230 = scalar_lea.vmem %s3, %s229
        %p231 = pneg %p117
        %p232 = pneg %p114
        %p233 = pneg %p143
        %p234 = pneg %p140
        %s235 = sand.u32 %s130, 1
        %s236 = scalar_lea.sflag [#allocation3], %s235
        %s237 = sand.u32 %s130, 1
        %s238 = scalar_lea.vmem [#allocation2], %s237
        %s239 = smul.u32 16, %s18
        %p240 = scmp.lt.s32.totalorder %s239, 31
        %s241 = scalar_select %p240, %s239, 31
        %s242 = smul.addr %s241, 8
        %s243 = scalar_lea.vmem %s0, %s242
        %s244 = smul.u32 16, %s18
        %s245 = smul.u32 16, %s18
        %p246 = scmp.lt.s32.totalorder %s245, 31
        %s247 = scalar_select %p246, %s245, 31
        %s248 = smul.addr %s247, 8
        %s249 = scalar_lea.vmem %s1, %s248
        %s250 = smul.u32 16, %s18
        %s251 = smul.u32 16, %s18
        %p252 = scmp.lt.s32.totalorder %s251, 31
        %s253 = scalar_select %p252, %s251, 31
        %s254 = smul.addr %s253, 8
        %s255 = scalar_lea.vmem %s2, %s254
        %s256 = smul.u32 16, %s18
        %s257 = smul.u32 16, %s18
        %p258 = scmp.lt.s32.totalorder %s257, 31
        %s259 = scalar_select %p258, %s257, 31
        %s260 = smul.addr %s259, 8
        %s261 = scalar_lea.vmem %s3, %s260
        %s262 = smul.u32 16, %s18
        %v263 = vld [vmem:[%s243] sm:$0xff]
        %v264 = vld [vmem:[%s243 + $0x8] sm:$0xff]
        %v265 = vld [vmem:[%s243 + $0x10] sm:$0xff]
        %v266 = vld [vmem:[%s243 + $0x18] sm:$0xff]
        %v267 = vld [vmem:[%s243 + $0x20] sm:$0xff]
        %v268 = vld [vmem:[%s243 + $0x28] sm:$0xff]
        %v269 = vld [vmem:[%s243 + $0x30] sm:$0xff]
        %v270 = vld [vmem:[%s243 + $0x38] sm:$0xff]
        %v271 = vld [vmem:[%s243 + $0x40] sm:$0xff]
        %v272 = vld [vmem:[%s243 + $0x48] sm:$0xff]
        %v273 = vld [vmem:[%s243 + $0x50] sm:$0xff]
        %v274 = vld [vmem:[%s243 + $0x58] sm:$0xff]
        %v275 = vld [vmem:[%s243 + $0x60] sm:$0xff]
        %v276 = vld [vmem:[%s243 + $0x68] sm:$0xff]
        %v277 = vld [vmem:[%s243 + $0x70] sm:$0xff]
        %v278 = vld [vmem:[%s243 + $0x78] sm:$0xff]
        %s279 = smul.u32 %s18, 128
        %v280 = vlaneseq
        %v281 = vshrl.u32 %v280, 7
        %v282 = vadd.s32 %v281, 8
        %v283 = vadd.s32 %v281, 16
        %v284 = vadd.s32 %v281, 24
        %v285 = vadd.s32 %v281, 32
        %v286 = vadd.s32 %v281, 40
        %v287 = vadd.s32 %v281, 48
        %v288 = vadd.s32 %v281, 56
        %v289 = vadd.s32 %v281, 64
        %v290 = vadd.s32 %v281, 72
        %v291 = vadd.s32 %v281, 80
        %v292 = vadd.s32 %v281, 88
        %v293 = vadd.s32 %v281, 96
        %v294 = vadd.s32 %v281, 104
        %v295 = vadd.s32 %v281, 112
        %v296 = vadd.s32 %v281, 120
        %v297 = vstv %s279
        %v298 = vadd.s32 %v297, %v281
        %v299 = vadd.s32 %v297, %v282
        %v300 = vadd.s32 %v297, %v283
        %v301 = vadd.s32 %v297, %v284
        %v302 = vadd.s32 %v297, %v285
        %v303 = vadd.s32 %v297, %v286
        %v304 = vadd.s32 %v297, %v287
        %v305 = vadd.s32 %v297, %v288
        %v306 = vadd.s32 %v297, %v289
        %v307 = vadd.s32 %v297, %v290
        %v308 = vadd.s32 %v297, %v291
        %v309 = vadd.s32 %v297, %v292
        %v310 = vadd.s32 %v297, %v293
        %v311 = vadd.s32 %v297, %v294
        %v312 = vadd.s32 %v297, %v295
        %v313 = vadd.s32 %v297, %v296
        %vm314 = vcmp.lt.s32.totalorder %v298, 250
        %vm315 = vcmp.lt.s32.totalorder %v299, 250
        %vm316 = vcmp.lt.s32.totalorder %v300, 250
        %vm317 = vcmp.lt.s32.totalorder %v301, 250
        %vm318 = vcmp.lt.s32.totalorder %v302, 250
        %vm319 = vcmp.lt.s32.totalorder %v303, 250
        %vm320 = vcmp.lt.s32.totalorder %v304, 250
        %vm321 = vcmp.lt.s32.totalorder %v305, 250
        %vm322 = vcmp.lt.s32.totalorder %v306, 250
        %vm323 = vcmp.lt.s32.totalorder %v307, 250
        %vm324 = vcmp.lt.s32.totalorder %v308, 250
        %vm325 = vcmp.lt.s32.totalorder %v309, 250
        %vm326 = vcmp.lt.s32.totalorder %v310, 250
        %vm327 = vcmp.lt.s32.totalorder %v311, 250
        %vm328 = vcmp.lt.s32.totalorder %v312, 250
        %vm329 = vcmp.lt.s32.totalorder %v313, 250
        %vm330 = vcmp.eq.s32.totalorder %v263, 0
        %vm331 = vcmp.eq.s32.totalorder %v264, 0
        %vm332 = vcmp.eq.s32.totalorder %v265, 0
        %vm333 = vcmp.eq.s32.totalorder %v266, 0
        %vm334 = vcmp.eq.s32.totalorder %v267, 0
        %vm335 = vcmp.eq.s32.totalorder %v268, 0
        %vm336 = vcmp.eq.s32.totalorder %v269, 0
        %vm337 = vcmp.eq.s32.totalorder %v270, 0
        %vm338 = vcmp.eq.s32.totalorder %v271, 0
        %vm339 = vcmp.eq.s32.totalorder %v272, 0
        %vm340 = vcmp.eq.s32.totalorder %v273, 0
        %vm341 = vcmp.eq.s32.totalorder %v274, 0
        %vm342 = vcmp.eq.s32.totalorder %v275, 0
        %vm343 = vcmp.eq.s32.totalorder %v276, 0
        %vm344 = vcmp.eq.s32.totalorder %v277, 0
        %vm345 = vcmp.eq.s32.totalorder %v278, 0
        %vm346 = vmand %vm330, %vm314
        %vm347 = vmand %vm331, %vm315
        %vm348 = vmand %vm332, %vm316
        %vm349 = vmand %vm333, %vm317
        %vm350 = vmand %vm334, %vm318
        %vm351 = vmand %vm335, %vm319
        %vm352 = vmand %vm336, %vm320
        %vm353 = vmand %vm337, %vm321
        %vm354 = vmand %vm338, %vm322
        %vm355 = vmand %vm339, %vm323
        %vm356 = vmand %vm340, %vm324
        %vm357 = vmand %vm341, %vm325
        %vm358 = vmand %vm342, %vm326
        %vm359 = vmand %vm343, %vm327
        %vm360 = vmand %vm344, %vm328
        %vm361 = vmand %vm345, %vm329
        %vm362 = vcmp.eq.s32.totalorder %v263, 1
        %vm363 = vcmp.eq.s32.totalorder %v264, 1
        %vm364 = vcmp.eq.s32.totalorder %v265, 1
        %vm365 = vcmp.eq.s32.totalorder %v266, 1
        %vm366 = vcmp.eq.s32.totalorder %v267, 1
        %vm367 = vcmp.eq.s32.totalorder %v268, 1
        %vm368 = vcmp.eq.s32.totalorder %v269, 1
        %vm369 = vcmp.eq.s32.totalorder %v270, 1
        %vm370 = vcmp.eq.s32.totalorder %v271, 1
        %vm371 = vcmp.eq.s32.totalorder %v272, 1
        %vm372 = vcmp.eq.s32.totalorder %v273, 1
        %vm373 = vcmp.eq.s32.totalorder %v274, 1
        %vm374 = vcmp.eq.s32.totalorder %v275, 1
        %vm375 = vcmp.eq.s32.totalorder %v276, 1
        %vm376 = vcmp.eq.s32.totalorder %v277, 1
        %vm377 = vcmp.eq.s32.totalorder %v278, 1
        %vm378 = vmand %vm362, %vm314
        %vm379 = vmand %vm363, %vm315
        %vm380 = vmand %vm364, %vm316
        %vm381 = vmand %vm365, %vm317
        %vm382 = vmand %vm366, %vm318
        %vm383 = vmand %vm367, %vm319
        %vm384 = vmand %vm368, %vm320
        %vm385 = vmand %vm369, %vm321
        %vm386 = vmand %vm370, %vm322
        %vm387 = vmand %vm371, %vm323
        %vm388 = vmand %vm372, %vm324
        %vm389 = vmand %vm373, %vm325
        %vm390 = vmand %vm374, %vm326
        %vm391 = vmand %vm375, %vm327
        %vm392 = vmand %vm376, %vm328
        %vm393 = vmand %vm377, %vm329
        %v394 = vld [vmem:[%s249] sm:$0xff]
        %v395 = vld [vmem:[%s249 + $0x8] sm:$0xff]
        %v396 = vld [vmem:[%s249 + $0x10] sm:$0xff]
        %v397 = vld [vmem:[%s249 + $0x18] sm:$0xff]
        %v398 = vld [vmem:[%s249 + $0x20] sm:$0xff]
        %v399 = vld [vmem:[%s249 + $0x28] sm:$0xff]
        %v400 = vld [vmem:[%s249 + $0x30] sm:$0xff]
        %v401 = vld [vmem:[%s249 + $0x38] sm:$0xff]
        %v402 = vld [vmem:[%s249 + $0x40] sm:$0xff]
        %v403 = vld [vmem:[%s249 + $0x48] sm:$0xff]
        %v404 = vld [vmem:[%s249 + $0x50] sm:$0xff]
        %v405 = vld [vmem:[%s249 + $0x58] sm:$0xff]
        %v406 = vld [vmem:[%s249 + $0x60] sm:$0xff]
        %v407 = vld [vmem:[%s249 + $0x68] sm:$0xff]
        %v408 = vld [vmem:[%s249 + $0x70] sm:$0xff]
        %v409 = vld [vmem:[%s249 + $0x78] sm:$0xff]
        %v410 = vld [vmem:[%s255] sm:$0xff]
        %v411 = vld [vmem:[%s255 + $0x8] sm:$0xff]
        %v412 = vld [vmem:[%s255 + $0x10] sm:$0xff]
        %v413 = vld [vmem:[%s255 + $0x18] sm:$0xff]
        %v414 = vld [vmem:[%s255 + $0x20] sm:$0xff]
        %v415 = vld [vmem:[%s255 + $0x28] sm:$0xff]
        %v416 = vld [vmem:[%s255 + $0x30] sm:$0xff]
        %v417 = vld [vmem:[%s255 + $0x38] sm:$0xff]
        %v418 = vld [vmem:[%s255 + $0x40] sm:$0xff]
        %v419 = vld [vmem:[%s255 + $0x48] sm:$0xff]
        %v420 = vld [vmem:[%s255 + $0x50] sm:$0xff]
        %v421 = vld [vmem:[%s255 + $0x58] sm:$0xff]
        %v422 = vld [vmem:[%s255 + $0x60] sm:$0xff]
        %v423 = vld [vmem:[%s255 + $0x68] sm:$0xff]
        %v424 = vld [vmem:[%s255 + $0x70] sm:$0xff]
        %v425 = vld [vmem:[%s255 + $0x78] sm:$0xff]
        %v426 = vsub.f32 %v394, %v410
        %v427 = vsub.f32 %v395, %v411
        %v428 = vsub.f32 %v396, %v412
        %v429 = vsub.f32 %v397, %v413
        %v430 = vsub.f32 %v398, %v414
        %v431 = vsub.f32 %v399, %v415
        %v432 = vsub.f32 %v400, %v416
        %v433 = vsub.f32 %v401, %v417
        %v434 = vsub.f32 %v402, %v418
        %v435 = vsub.f32 %v403, %v419
        %v436 = vsub.f32 %v404, %v420
        %v437 = vsub.f32 %v405, %v421
        %v438 = vsub.f32 %v406, %v422
        %v439 = vsub.f32 %v407, %v423
        %v440 = vsub.f32 %v408, %v424
        %v441 = vsub.f32 %v409, %v425
        %v442 = vmul.f32 %v426, %v426
        %v443 = vmul.f32 %v427, %v427
        %v444 = vmul.f32 %v428, %v428
        %v445 = vmul.f32 %v429, %v429
        %v446 = vmul.f32 %v430, %v430
        %v447 = vmul.f32 %v431, %v431
        %v448 = vmul.f32 %v432, %v432
        %v449 = vmul.f32 %v433, %v433
        %v450 = vmul.f32 %v434, %v434
        %v451 = vmul.f32 %v435, %v435
        %v452 = vmul.f32 %v436, %v436
        %v453 = vmul.f32 %v437, %v437
        %v454 = vmul.f32 %v438, %v438
        %v455 = vmul.f32 %v439, %v439
        %v456 = vmul.f32 %v440, %v440
        %v457 = vmul.f32 %v441, %v441
        %vm458 = vcmask 261120
        %v459 = vsel %vm458, %v442, 0.0
        %460 = vadd.xlane.f32.xlu0 %v459
        %v461 = vpop.xlane.xlu0 %460
        %v462 = vsel %vm458, %v443, 0.0
        %463 = vadd.xlane.f32.xlu0 %v462
        %v464 = vpop.xlane.xlu0 %463
        %v465 = vsel %vm458, %v444, 0.0
        %466 = vadd.xlane.f32.xlu0 %v465
        %v467 = vpop.xlane.xlu0 %466
        %v468 = vsel %vm458, %v445, 0.0
        %469 = vadd.xlane.f32.xlu0 %v468
        %v470 = vpop.xlane.xlu0 %469
        %v471 = vsel %vm458, %v446, 0.0
        %472 = vadd.xlane.f32.xlu0 %v471
        %v473 = vpop.xlane.xlu0 %472
        %v474 = vsel %vm458, %v447, 0.0
        %475 = vadd.xlane.f32.xlu0 %v474
        %v476 = vpop.xlane.xlu0 %475
        %v477 = vsel %vm458, %v448, 0.0
        %478 = vadd.xlane.f32.xlu0 %v477
        %v479 = vpop.xlane.xlu0 %478
        %v480 = vsel %vm458, %v449, 0.0
        %481 = vadd.xlane.f32.xlu0 %v480
        %v482 = vpop.xlane.xlu0 %481
        %v483 = vsel %vm458, %v450, 0.0
        %484 = vadd.xlane.f32.xlu0 %v483
        %v485 = vpop.xlane.xlu0 %484
        %v486 = vsel %vm458, %v451, 0.0
        %487 = vadd.xlane.f32.xlu0 %v486
        %v488 = vpop.xlane.xlu0 %487
        %v489 = vsel %vm458, %v452, 0.0
        %490 = vadd.xlane.f32.xlu0 %v489
        %v491 = vpop.xlane.xlu0 %490
        %v492 = vsel %vm458, %v453, 0.0
        %493 = vadd.xlane.f32.xlu0 %v492
        %v494 = vpop.xlane.xlu0 %493
        %v495 = vsel %vm458, %v454, 0.0
        %496 = vadd.xlane.f32.xlu0 %v495
        %v497 = vpop.xlane.xlu0 %496
        %v498 = vsel %vm458, %v455, 0.0
        %499 = vadd.xlane.f32.xlu0 %v498
        %v500 = vpop.xlane.xlu0 %499
        %v501 = vsel %vm458, %v456, 0.0
        %502 = vadd.xlane.f32.xlu0 %v501
        %v503 = vpop.xlane.xlu0 %502
        %v504 = vsel %vm458, %v457, 0.0
        %505 = vadd.xlane.f32.xlu0 %v504
        %v506 = vpop.xlane.xlu0 %505
        %v507 = vsel %vm346, %v461, 0.0
        %v508 = vsel %vm347, %v464, 0.0
        %v509 = vsel %vm348, %v467, 0.0
        %v510 = vsel %vm349, %v470, 0.0
        %v511 = vsel %vm350, %v473, 0.0
        %v512 = vsel %vm351, %v476, 0.0
        %v513 = vsel %vm352, %v479, 0.0
        %v514 = vsel %vm353, %v482, 0.0
        %v515 = vsel %vm354, %v485, 0.0
        %v516 = vsel %vm355, %v488, 0.0
        %v517 = vsel %vm356, %v491, 0.0
        %v518 = vsel %vm357, %v494, 0.0
        %v519 = vsel %vm358, %v497, 0.0
        %v520 = vsel %vm359, %v500, 0.0
        %v521 = vsel %vm360, %v503, 0.0
        %v522 = vsel %vm361, %v506, 0.0
        %vm523 = vcmask 7168
        %v524 = vsel %vm523, %v507, 0.0
        %v525 = vsel %vm523, %v508, 0.0
        %v526 = vadd.f32 %v524, %v525
        %v527 = vsel %vm523, %v509, 0.0
        %v528 = vadd.f32 %v526, %v527
        %v529 = vsel %vm523, %v510, 0.0
        %v530 = vadd.f32 %v528, %v529
        %v531 = vsel %vm523, %v511, 0.0
        %v532 = vadd.f32 %v530, %v531
        %v533 = vsel %vm523, %v512, 0.0
        %v534 = vadd.f32 %v532, %v533
        %v535 = vsel %vm523, %v513, 0.0
        %v536 = vadd.f32 %v534, %v535
        %v537 = vsel %vm523, %v514, 0.0
        %v538 = vadd.f32 %v536, %v537
        %v539 = vsel %vm523, %v515, 0.0
        %v540 = vadd.f32 %v538, %v539
        %v541 = vsel %vm523, %v516, 0.0
        %v542 = vadd.f32 %v540, %v541
        %v543 = vsel %vm523, %v517, 0.0
        %v544 = vadd.f32 %v542, %v543
        %v545 = vsel %vm523, %v518, 0.0
        %v546 = vadd.f32 %v544, %v545
        %v547 = vsel %vm523, %v519, 0.0
        %v548 = vadd.f32 %v546, %v547
        %v549 = vsel %vm523, %v520, 0.0
        %v550 = vadd.f32 %v548, %v549
        %v551 = vsel %vm523, %v521, 0.0
        %v552 = vadd.f32 %v550, %v551
        %v553 = vsel %vm523, %v522, 0.0
        %v554 = vadd.f32 %v552, %v553
        %555 = vadd.xlane.f32.xlu0 %v554
        %v556 = vpop.xlane.xlu0 %555
        %v557 = vrot.slane %v556, 4
        %v558 = vadd.f32 %v556, %v557
        %v559 = vrot.slane %v558, 2
        %v560 = vadd.f32 %v558, %v559
        %v561 = vrot.slane %v560, 1
        %v562 = vadd.f32 %v560, %v561
        %s563 = vtos %v562
        %v564 = vsel %vm346, 1.0, 0.0
        %v565 = vsel %vm347, 1.0, 0.0
        %v566 = vsel %vm348, 1.0, 0.0
        %v567 = vsel %vm349, 1.0, 0.0
        %v568 = vsel %vm350, 1.0, 0.0
        %v569 = vsel %vm351, 1.0, 0.0
        %v570 = vsel %vm352, 1.0, 0.0
        %v571 = vsel %vm353, 1.0, 0.0
        %v572 = vsel %vm354, 1.0, 0.0
        %v573 = vsel %vm355, 1.0, 0.0
        %v574 = vsel %vm356, 1.0, 0.0
        %v575 = vsel %vm357, 1.0, 0.0
        %v576 = vsel %vm358, 1.0, 0.0
        %v577 = vsel %vm359, 1.0, 0.0
        %v578 = vsel %vm360, 1.0, 0.0
        %v579 = vsel %vm361, 1.0, 0.0
        %v580 = vsel %vm523, %v564, 0.0
        %v581 = vsel %vm523, %v565, 0.0
        %v582 = vadd.f32 %v580, %v581
        %v583 = vsel %vm523, %v566, 0.0
        %v584 = vadd.f32 %v582, %v583
        %v585 = vsel %vm523, %v567, 0.0
        %v586 = vadd.f32 %v584, %v585
        %v587 = vsel %vm523, %v568, 0.0
        %v588 = vadd.f32 %v586, %v587
        %v589 = vsel %vm523, %v569, 0.0
        %v590 = vadd.f32 %v588, %v589
        %v591 = vsel %vm523, %v570, 0.0
        %v592 = vadd.f32 %v590, %v591
        %v593 = vsel %vm523, %v571, 0.0
        %v594 = vadd.f32 %v592, %v593
        %v595 = vsel %vm523, %v572, 0.0
        %v596 = vadd.f32 %v594, %v595
        %v597 = vsel %vm523, %v573, 0.0
        %v598 = vadd.f32 %v596, %v597
        %v599 = vsel %vm523, %v574, 0.0
        %v600 = vadd.f32 %v598, %v599
        %v601 = vsel %vm523, %v575, 0.0
        %v602 = vadd.f32 %v600, %v601
        %v603 = vsel %vm523, %v576, 0.0
        %v604 = vadd.f32 %v602, %v603
        %v605 = vsel %vm523, %v577, 0.0
        %v606 = vadd.f32 %v604, %v605
        %v607 = vsel %vm523, %v578, 0.0
        %v608 = vadd.f32 %v606, %v607
        %v609 = vsel %vm523, %v579, 0.0
        %v610 = vadd.f32 %v608, %v609
        %611 = vadd.xlane.f32.xlu0 %v610
        %v612 = vpop.xlane.xlu0 %611
        %v613 = vrot.slane %v612, 4
        %v614 = vadd.f32 %v612, %v613
        %v615 = vrot.slane %v614, 2
        %v616 = vadd.f32 %v614, %v615
        %v617 = vrot.slane %v616, 1
        %v618 = vadd.f32 %v616, %v617
        %s619 = vtos %v618
        %v620 = vld [vmem:[%s261] sm:$0xff]
        %v621 = vld [vmem:[%s261 + $0x8] sm:$0xff]
        %v622 = vld [vmem:[%s261 + $0x10] sm:$0xff]
        %v623 = vld [vmem:[%s261 + $0x18] sm:$0xff]
        %v624 = vld [vmem:[%s261 + $0x20] sm:$0xff]
        %v625 = vld [vmem:[%s261 + $0x28] sm:$0xff]
        %v626 = vld [vmem:[%s261 + $0x30] sm:$0xff]
        %v627 = vld [vmem:[%s261 + $0x38] sm:$0xff]
        %v628 = vld [vmem:[%s261 + $0x40] sm:$0xff]
        %v629 = vld [vmem:[%s261 + $0x48] sm:$0xff]
        %v630 = vld [vmem:[%s261 + $0x50] sm:$0xff]
        %v631 = vld [vmem:[%s261 + $0x58] sm:$0xff]
        %v632 = vld [vmem:[%s261 + $0x60] sm:$0xff]
        %v633 = vld [vmem:[%s261 + $0x68] sm:$0xff]
        %v634 = vld [vmem:[%s261 + $0x70] sm:$0xff]
        %v635 = vld [vmem:[%s261 + $0x78] sm:$0xff]
        %vm636 = vcmask 130048
        %v637 = vsel %vm636, %v620, -inf
        %638 = vmax.xlane.f32.xlu0 %v637
        %v639 = vpop.xlane.xlu0 %638
        %v640 = vsel %vm636, %v621, -inf
        %641 = vmax.xlane.f32.xlu0 %v640
        %v642 = vpop.xlane.xlu0 %641
        %v643 = vsel %vm636, %v622, -inf
        %644 = vmax.xlane.f32.xlu0 %v643
        %v645 = vpop.xlane.xlu0 %644
        %v646 = vsel %vm636, %v623, -inf
        %647 = vmax.xlane.f32.xlu0 %v646
        %v648 = vpop.xlane.xlu0 %647
        %v649 = vsel %vm636, %v624, -inf
        %650 = vmax.xlane.f32.xlu0 %v649
        %v651 = vpop.xlane.xlu0 %650
        %v652 = vsel %vm636, %v625, -inf
        %653 = vmax.xlane.f32.xlu0 %v652
        %v654 = vpop.xlane.xlu0 %653
        %v655 = vsel %vm636, %v626, -inf
        %656 = vmax.xlane.f32.xlu0 %v655
        %v657 = vpop.xlane.xlu0 %656
        %v658 = vsel %vm636, %v627, -inf
        %659 = vmax.xlane.f32.xlu0 %v658
        %v660 = vpop.xlane.xlu0 %659
        %v661 = vsel %vm636, %v628, -inf
        %662 = vmax.xlane.f32.xlu0 %v661
        %v663 = vpop.xlane.xlu0 %662
        %v664 = vsel %vm636, %v629, -inf
        %665 = vmax.xlane.f32.xlu0 %v664
        %v666 = vpop.xlane.xlu0 %665
        %v667 = vsel %vm636, %v630, -inf
        %668 = vmax.xlane.f32.xlu0 %v667
        %v669 = vpop.xlane.xlu0 %668
        %v670 = vsel %vm636, %v631, -inf
        %671 = vmax.xlane.f32.xlu0 %v670
        %v672 = vpop.xlane.xlu0 %671
        %v673 = vsel %vm636, %v632, -inf
        %674 = vmax.xlane.f32.xlu0 %v673
        %v675 = vpop.xlane.xlu0 %674
        %v676 = vsel %vm636, %v633, -inf
        %677 = vmax.xlane.f32.xlu0 %v676
        %v678 = vpop.xlane.xlu0 %677
        %v679 = vsel %vm636, %v634, -inf
        %680 = vmax.xlane.f32.xlu0 %v679
        %v681 = vpop.xlane.xlu0 %680
        %v682 = vsel %vm636, %v635, -inf
        %683 = vmax.xlane.f32.xlu0 %v682
        %v684 = vpop.xlane.xlu0 %683
        %v685 = vsub.f32 %v620, %v639
        %v686 = vsub.f32 %v621, %v642
        %v687 = vsub.f32 %v622, %v645
        %v688 = vsub.f32 %v623, %v648
        %v689 = vsub.f32 %v624, %v651
        %v690 = vsub.f32 %v625, %v654
        %v691 = vsub.f32 %v626, %v657
        %v692 = vsub.f32 %v627, %v660
        %v693 = vsub.f32 %v628, %v663
        %v694 = vsub.f32 %v629, %v666
        %v695 = vsub.f32 %v630, %v669
        %v696 = vsub.f32 %v631, %v672
        %v697 = vsub.f32 %v632, %v675
        %v698 = vsub.f32 %v633, %v678
        %v699 = vsub.f32 %v634, %v681
        %v700 = vsub.f32 %v635, %v684
        %v701 = vmul.f32 %v685, 1.442695
        %v702 = vpow.pop %v701
        %v703 = vmul.f32 %v686, 1.442695
        %v704 = vpow.pop %v703
        %v705 = vmul.f32 %v687, 1.442695
        %v706 = vpow.pop %v705
        %v707 = vmul.f32 %v688, 1.442695
        %v708 = vpow.pop %v707
        %v709 = vmul.f32 %v689, 1.442695
        %v710 = vpow.pop %v709
        %v711 = vmul.f32 %v690, 1.442695
        %v712 = vpow.pop %v711
        %v713 = vmul.f32 %v691, 1.442695
        %v714 = vpow.pop %v713
        %v715 = vmul.f32 %v692, 1.442695
        %v716 = vpow.pop %v715
        %v717 = vmul.f32 %v693, 1.442695
        %v718 = vpow.pop %v717
        %v719 = vmul.f32 %v694, 1.442695
        %v720 = vpow.pop %v719
        %v721 = vmul.f32 %v695, 1.442695
        %v722 = vpow.pop %v721
        %v723 = vmul.f32 %v696, 1.442695
        %v724 = vpow.pop %v723
        %v725 = vmul.f32 %v697, 1.442695
        %v726 = vpow.pop %v725
        %v727 = vmul.f32 %v698, 1.442695
        %v728 = vpow.pop %v727
        %v729 = vmul.f32 %v699, 1.442695
        %v730 = vpow.pop %v729
        %v731 = vmul.f32 %v700, 1.442695
        %v732 = vpow.pop %v731
        %v733 = vsel %vm636, %v702, 0.0
        %734 = vadd.xlane.f32.xlu0 %v733
        %v735 = vpop.xlane.xlu0 %734
        %v736 = vsel %vm636, %v704, 0.0
        %737 = vadd.xlane.f32.xlu0 %v736
        %v738 = vpop.xlane.xlu0 %737
        %v739 = vsel %vm636, %v706, 0.0
        %740 = vadd.xlane.f32.xlu0 %v739
        %v741 = vpop.xlane.xlu0 %740
        %v742 = vsel %vm636, %v708, 0.0
        %743 = vadd.xlane.f32.xlu0 %v742
        %v744 = vpop.xlane.xlu0 %743
        %v745 = vsel %vm636, %v710, 0.0
        %746 = vadd.xlane.f32.xlu0 %v745
        %v747 = vpop.xlane.xlu0 %746
        %v748 = vsel %vm636, %v712, 0.0
        %749 = vadd.xlane.f32.xlu0 %v748
        %v750 = vpop.xlane.xlu0 %749
        %v751 = vsel %vm636, %v714, 0.0
        %752 = vadd.xlane.f32.xlu0 %v751
        %v753 = vpop.xlane.xlu0 %752
        %v754 = vsel %vm636, %v716, 0.0
        %755 = vadd.xlane.f32.xlu0 %v754
        %v756 = vpop.xlane.xlu0 %755
        %v757 = vsel %vm636, %v718, 0.0
        %758 = vadd.xlane.f32.xlu0 %v757
        %v759 = vpop.xlane.xlu0 %758
        %v760 = vsel %vm636, %v720, 0.0
        %761 = vadd.xlane.f32.xlu0 %v760
        %v762 = vpop.xlane.xlu0 %761
        %v763 = vsel %vm636, %v722, 0.0
        %764 = vadd.xlane.f32.xlu0 %v763
        %v765 = vpop.xlane.xlu0 %764
        %v766 = vsel %vm636, %v724, 0.0
        %767 = vadd.xlane.f32.xlu0 %v766
        %v768 = vpop.xlane.xlu0 %767
        %v769 = vsel %vm636, %v726, 0.0
        %770 = vadd.xlane.f32.xlu0 %v769
        %v771 = vpop.xlane.xlu0 %770
        %v772 = vsel %vm636, %v728, 0.0
        %773 = vadd.xlane.f32.xlu0 %v772
        %v774 = vpop.xlane.xlu0 %773
        %v775 = vsel %vm636, %v730, 0.0
        %776 = vadd.xlane.f32.xlu0 %v775
        %v777 = vpop.xlane.xlu0 %776
        %v778 = vsel %vm636, %v732, 0.0
        %779 = vadd.xlane.f32.xlu0 %v778
        %v780 = vpop.xlane.xlu0 %779
        %v781 = vlog2.pop %v735
        %v782 = vmul.f32 %v781, 0.6931472
        %v783 = vlog2.pop %v738
        %v784 = vmul.f32 %v783, 0.6931472
        %v785 = vlog2.pop %v741
        %v786 = vmul.f32 %v785, 0.6931472
        %v787 = vlog2.pop %v744
        %v788 = vmul.f32 %v787, 0.6931472
        %v789 = vlog2.pop %v747
        %v790 = vmul.f32 %v789, 0.6931472
        %v791 = vlog2.pop %v750
        %v792 = vmul.f32 %v791, 0.6931472
        %v793 = vlog2.pop %v753
        %v794 = vmul.f32 %v793, 0.6931472
        %v795 = vlog2.pop %v756
        %v796 = vmul.f32 %v795, 0.6931472
        %v797 = vlog2.pop %v759
        %v798 = vmul.f32 %v797, 0.6931472
        %v799 = vlog2.pop %v762
        %v800 = vmul.f32 %v799, 0.6931472
        %v801 = vlog2.pop %v765
        %v802 = vmul.f32 %v801, 0.6931472
        %v803 = vlog2.pop %v768
        %v804 = vmul.f32 %v803, 0.6931472
        %v805 = vlog2.pop %v771
        %v806 = vmul.f32 %v805, 0.6931472
        %v807 = vlog2.pop %v774
        %v808 = vmul.f32 %v807, 0.6931472
        %v809 = vlog2.pop %v777
        %v810 = vmul.f32 %v809, 0.6931472
        %v811 = vlog2.pop %v780
        %v812 = vmul.f32 %v811, 0.6931472
        %v813 = vadd.f32 %v639, %v782
        %v814 = vadd.f32 %v642, %v784
        %v815 = vadd.f32 %v645, %v786
        %v816 = vadd.f32 %v648, %v788
        %v817 = vadd.f32 %v651, %v790
        %v818 = vadd.f32 %v654, %v792
        %v819 = vadd.f32 %v657, %v794
        %v820 = vadd.f32 %v660, %v796
        %v821 = vadd.f32 %v663, %v798
        %v822 = vadd.f32 %v666, %v800
        %v823 = vadd.f32 %v669, %v802
        %v824 = vadd.f32 %v672, %v804
        %v825 = vadd.f32 %v675, %v806
        %v826 = vadd.f32 %v678, %v808
        %v827 = vadd.f32 %v681, %v810
        %v828 = vadd.f32 %v684, %v812
        %v829 = vlaneseq
        %v830 = vand.u32 %v829, 127
        %831 = vset.pattern.permute.xlu0 1
        %832 = vperm.xlu0 %831, %v263
        %v833 = vpop.permute.xlu0 %832
        %834 = vset.pattern.permute.xlu0 1
        %835 = vperm.xlu0 %834, %v264
        %v836 = vpop.permute.xlu0 %835
        %837 = vset.pattern.permute.xlu0 1
        %838 = vperm.xlu0 %837, %v265
        %v839 = vpop.permute.xlu0 %838
        %840 = vset.pattern.permute.xlu0 1
        %841 = vperm.xlu0 %840, %v266
        %v842 = vpop.permute.xlu0 %841
        %843 = vset.pattern.permute.xlu0 1
        %844 = vperm.xlu0 %843, %v267
        %v845 = vpop.permute.xlu0 %844
        %846 = vset.pattern.permute.xlu0 1
        %847 = vperm.xlu0 %846, %v268
        %v848 = vpop.permute.xlu0 %847
        %849 = vset.pattern.permute.xlu0 1
        %850 = vperm.xlu0 %849, %v269
        %v851 = vpop.permute.xlu0 %850
        %852 = vset.pattern.permute.xlu0 1
        %853 = vperm.xlu0 %852, %v270
        %v854 = vpop.permute.xlu0 %853
        %855 = vset.pattern.permute.xlu0 1
        %856 = vperm.xlu0 %855, %v271
        %v857 = vpop.permute.xlu0 %856
        %858 = vset.pattern.permute.xlu0 1
        %859 = vperm.xlu0 %858, %v272
        %v860 = vpop.permute.xlu0 %859
        %861 = vset.pattern.permute.xlu0 1
        %862 = vperm.xlu0 %861, %v273
        %v863 = vpop.permute.xlu0 %862
        %864 = vset.pattern.permute.xlu0 1
        %865 = vperm.xlu0 %864, %v274
        %v866 = vpop.permute.xlu0 %865
        %867 = vset.pattern.permute.xlu0 1
        %868 = vperm.xlu0 %867, %v275
        %v869 = vpop.permute.xlu0 %868
        %870 = vset.pattern.permute.xlu0 1
        %871 = vperm.xlu0 %870, %v276
        %v872 = vpop.permute.xlu0 %871
        %873 = vset.pattern.permute.xlu0 1
        %874 = vperm.xlu0 %873, %v277
        %v875 = vpop.permute.xlu0 %874
        %876 = vset.pattern.permute.xlu0 1
        %877 = vperm.xlu0 %876, %v278
        %v878 = vpop.permute.xlu0 %877
        %vm879 = vcmp.eq.s32.totalorder %v830, %v833
        %vm880 = vcmp.eq.s32.totalorder %v830, %v836
        %vm881 = vcmp.eq.s32.totalorder %v830, %v839
        %vm882 = vcmp.eq.s32.totalorder %v830, %v842
        %vm883 = vcmp.eq.s32.totalorder %v830, %v845
        %vm884 = vcmp.eq.s32.totalorder %v830, %v848
        %vm885 = vcmp.eq.s32.totalorder %v830, %v851
        %vm886 = vcmp.eq.s32.totalorder %v830, %v854
        %vm887 = vcmp.eq.s32.totalorder %v830, %v857
        %vm888 = vcmp.eq.s32.totalorder %v830, %v860
        %vm889 = vcmp.eq.s32.totalorder %v830, %v863
        %vm890 = vcmp.eq.s32.totalorder %v830, %v866
        %vm891 = vcmp.eq.s32.totalorder %v830, %v869
        %vm892 = vcmp.eq.s32.totalorder %v830, %v872
        %vm893 = vcmp.eq.s32.totalorder %v830, %v875
        %vm894 = vcmp.eq.s32.totalorder %v830, %v878
        %v895 = vsel %vm879, %v620, 0.0
        %v896 = vsel %vm880, %v621, 0.0
        %v897 = vsel %vm881, %v622, 0.0
        %v898 = vsel %vm882, %v623, 0.0
        %v899 = vsel %vm883, %v624, 0.0
        %v900 = vsel %vm884, %v625, 0.0
        %v901 = vsel %vm885, %v626, 0.0
        %v902 = vsel %vm886, %v627, 0.0
        %v903 = vsel %vm887, %v628, 0.0
        %v904 = vsel %vm888, %v629, 0.0
        %v905 = vsel %vm889, %v630, 0.0
        %v906 = vsel %vm890, %v631, 0.0
        %v907 = vsel %vm891, %v632, 0.0
        %v908 = vsel %vm892, %v633, 0.0
        %v909 = vsel %vm893, %v634, 0.0
        %v910 = vsel %vm894, %v635, 0.0
        %v911 = vsel %vm636, %v895, 0.0
        %912 = vadd.xlane.f32.xlu0 %v911
        %v913 = vpop.xlane.xlu0 %912
        %v914 = vsel %vm636, %v896, 0.0
        %915 = vadd.xlane.f32.xlu0 %v914
        %v916 = vpop.xlane.xlu0 %915
        %v917 = vsel %vm636, %v897, 0.0
        %918 = vadd.xlane.f32.xlu0 %v917
        %v919 = vpop.xlane.xlu0 %918
        %v920 = vsel %vm636, %v898, 0.0
        %921 = vadd.xlane.f32.xlu0 %v920
        %v922 = vpop.xlane.xlu0 %921
        %v923 = vsel %vm636, %v899, 0.0
        %924 = vadd.xlane.f32.xlu0 %v923
        %v925 = vpop.xlane.xlu0 %924
        %v926 = vsel %vm636, %v900, 0.0
        %927 = vadd.xlane.f32.xlu0 %v926
        %v928 = vpop.xlane.xlu0 %927
        %v929 = vsel %vm636, %v901, 0.0
        %930 = vadd.xlane.f32.xlu0 %v929
        %v931 = vpop.xlane.xlu0 %930
        %v932 = vsel %vm636, %v902, 0.0
        %933 = vadd.xlane.f32.xlu0 %v932
        %v934 = vpop.xlane.xlu0 %933
        %v935 = vsel %vm636, %v903, 0.0
        %936 = vadd.xlane.f32.xlu0 %v935
        %v937 = vpop.xlane.xlu0 %936
        %v938 = vsel %vm636, %v904, 0.0
        %939 = vadd.xlane.f32.xlu0 %v938
        %v940 = vpop.xlane.xlu0 %939
        %v941 = vsel %vm636, %v905, 0.0
        %942 = vadd.xlane.f32.xlu0 %v941
        %v943 = vpop.xlane.xlu0 %942
        %v944 = vsel %vm636, %v906, 0.0
        %945 = vadd.xlane.f32.xlu0 %v944
        %v946 = vpop.xlane.xlu0 %945
        %v947 = vsel %vm636, %v907, 0.0
        %948 = vadd.xlane.f32.xlu0 %v947
        %v949 = vpop.xlane.xlu0 %948
        %v950 = vsel %vm636, %v908, 0.0
        %951 = vadd.xlane.f32.xlu0 %v950
        %v952 = vpop.xlane.xlu0 %951
        %v953 = vsel %vm636, %v909, 0.0
        %954 = vadd.xlane.f32.xlu0 %v953
        %v955 = vpop.xlane.xlu0 %954
        %v956 = vsel %vm636, %v910, 0.0
        %957 = vadd.xlane.f32.xlu0 %v956
        %v958 = vpop.xlane.xlu0 %957
        %v959 = vsub.f32 %v813, %v913
        %v960 = vsub.f32 %v814, %v916
        %v961 = vsub.f32 %v815, %v919
        %v962 = vsub.f32 %v816, %v922
        %v963 = vsub.f32 %v817, %v925
        %v964 = vsub.f32 %v818, %v928
        %v965 = vsub.f32 %v819, %v931
        %v966 = vsub.f32 %v820, %v934
        %v967 = vsub.f32 %v821, %v937
        %v968 = vsub.f32 %v822, %v940
        %v969 = vsub.f32 %v823, %v943
        %v970 = vsub.f32 %v824, %v946
        %v971 = vsub.f32 %v825, %v949
        %v972 = vsub.f32 %v826, %v952
        %v973 = vsub.f32 %v827, %v955
        %v974 = vsub.f32 %v828, %v958
        %v975 = vsel %vm378, %v959, 0.0
        %v976 = vsel %vm379, %v960, 0.0
        %v977 = vsel %vm380, %v961, 0.0
        %v978 = vsel %vm381, %v962, 0.0
        %v979 = vsel %vm382, %v963, 0.0
        %v980 = vsel %vm383, %v964, 0.0
        %v981 = vsel %vm384, %v965, 0.0
        %v982 = vsel %vm385, %v966, 0.0
        %v983 = vsel %vm386, %v967, 0.0
        %v984 = vsel %vm387, %v968, 0.0
        %v985 = vsel %vm388, %v969, 0.0
        %v986 = vsel %vm389, %v970, 0.0
        %v987 = vsel %vm390, %v971, 0.0
        %v988 = vsel %vm391, %v972, 0.0
        %v989 = vsel %vm392, %v973, 0.0
        %v990 = vsel %vm393, %v974, 0.0
        %v991 = vsel %vm523, %v975, 0.0
        %v992 = vsel %vm523, %v976, 0.0
        %v993 = vadd.f32 %v991, %v992
        %v994 = vsel %vm523, %v977, 0.0
        %v995 = vadd.f32 %v993, %v994
        %v996 = vsel %vm523, %v978, 0.0
        %v997 = vadd.f32 %v995, %v996
        %v998 = vsel %vm523, %v979, 0.0
        %v999 = vadd.f32 %v997, %v998
        %v1000 = vsel %vm523, %v980, 0.0
        %v1001 = vadd.f32 %v999, %v1000
        %v1002 = vsel %vm523, %v981, 0.0
        %v1003 = vadd.f32 %v1001, %v1002
        %v1004 = vsel %vm523, %v982, 0.0
        %v1005 = vadd.f32 %v1003, %v1004
        %v1006 = vsel %vm523, %v983, 0.0
        %v1007 = vadd.f32 %v1005, %v1006
        %v1008 = vsel %vm523, %v984, 0.0
        %v1009 = vadd.f32 %v1007, %v1008
        %v1010 = vsel %vm523, %v985, 0.0
        %v1011 = vadd.f32 %v1009, %v1010
        %v1012 = vsel %vm523, %v986, 0.0
        %v1013 = vadd.f32 %v1011, %v1012
        %v1014 = vsel %vm523, %v987, 0.0
        %v1015 = vadd.f32 %v1013, %v1014
        %v1016 = vsel %vm523, %v988, 0.0
        %v1017 = vadd.f32 %v1015, %v1016
        %v1018 = vsel %vm523, %v989, 0.0
        %v1019 = vadd.f32 %v1017, %v1018
        %v1020 = vsel %vm523, %v990, 0.0
        %v1021 = vadd.f32 %v1019, %v1020
        %1022 = vadd.xlane.f32.xlu0 %v1021
        %v1023 = vpop.xlane.xlu0 %1022
        %v1024 = vrot.slane %v1023, 4
        %v1025 = vadd.f32 %v1023, %v1024
        %v1026 = vrot.slane %v1025, 2
        %v1027 = vadd.f32 %v1025, %v1026
        %v1028 = vrot.slane %v1027, 1
        %v1029 = vadd.f32 %v1027, %v1028
        %s1030 = vtos %v1029
        %v1031 = vsel %vm378, 1.0, 0.0
        %v1032 = vsel %vm379, 1.0, 0.0
        %v1033 = vsel %vm380, 1.0, 0.0
        %v1034 = vsel %vm381, 1.0, 0.0
        %v1035 = vsel %vm382, 1.0, 0.0
        %v1036 = vsel %vm383, 1.0, 0.0
        %v1037 = vsel %vm384, 1.0, 0.0
        %v1038 = vsel %vm385, 1.0, 0.0
        %v1039 = vsel %vm386, 1.0, 0.0
        %v1040 = vsel %vm387, 1.0, 0.0
        %v1041 = vsel %vm388, 1.0, 0.0
        %v1042 = vsel %vm389, 1.0, 0.0
        %v1043 = vsel %vm390, 1.0, 0.0
        %v1044 = vsel %vm391, 1.0, 0.0
        %v1045 = vsel %vm392, 1.0, 0.0
        %v1046 = vsel %vm393, 1.0, 0.0
        %v1047 = vsel %vm523, %v1031, 0.0
        %v1048 = vsel %vm523, %v1032, 0.0
        %v1049 = vadd.f32 %v1047, %v1048
        %v1050 = vsel %vm523, %v1033, 0.0
        %v1051 = vadd.f32 %v1049, %v1050
        %v1052 = vsel %vm523, %v1034, 0.0
        %v1053 = vadd.f32 %v1051, %v1052
        %v1054 = vsel %vm523, %v1035, 0.0
        %v1055 = vadd.f32 %v1053, %v1054
        %v1056 = vsel %vm523, %v1036, 0.0
        %v1057 = vadd.f32 %v1055, %v1056
        %v1058 = vsel %vm523, %v1037, 0.0
        %v1059 = vadd.f32 %v1057, %v1058
        %v1060 = vsel %vm523, %v1038, 0.0
        %v1061 = vadd.f32 %v1059, %v1060
        %v1062 = vsel %vm523, %v1039, 0.0
        %v1063 = vadd.f32 %v1061, %v1062
        %v1064 = vsel %vm523, %v1040, 0.0
        %v1065 = vadd.f32 %v1063, %v1064
        %v1066 = vsel %vm523, %v1041, 0.0
        %v1067 = vadd.f32 %v1065, %v1066
        %v1068 = vsel %vm523, %v1042, 0.0
        %v1069 = vadd.f32 %v1067, %v1068
        %v1070 = vsel %vm523, %v1043, 0.0
        %v1071 = vadd.f32 %v1069, %v1070
        %v1072 = vsel %vm523, %v1044, 0.0
        %v1073 = vadd.f32 %v1071, %v1072
        %v1074 = vsel %vm523, %v1045, 0.0
        %v1075 = vadd.f32 %v1073, %v1074
        %v1076 = vsel %vm523, %v1046, 0.0
        %v1077 = vadd.f32 %v1075, %v1076
        %1078 = vadd.xlane.f32.xlu0 %v1077
        %v1079 = vpop.xlane.xlu0 %1078
        %v1080 = vrot.slane %v1079, 4
        %v1081 = vadd.f32 %v1079, %v1080
        %v1082 = vrot.slane %v1081, 2
        %v1083 = vadd.f32 %v1081, %v1082
        %v1084 = vrot.slane %v1083, 1
        %v1085 = vadd.f32 %v1083, %v1084
        %s1086 = vtos %v1085
        %vm1087 = vcmp.eq.s32.totalorder %v830, 0
        %vm1088 = vcmp.eq.s32.totalorder %v830, 1
        %vm1089 = vcmp.eq.s32.totalorder %v830, 2
        %vm1090 = vcmp.eq.s32.totalorder %v830, 3
        %v1091 = vstv %s1086
        %v1092 = vsel %vm1090, %v1091, 0.0
        %v1093 = vstv %s1030
        %v1094 = vsel %vm1089, %v1093, %v1092
        %v1095 = vstv %s619
        %v1096 = vsel %vm1088, %v1095, %v1094
        %v1097 = vstv %s563
        %v1098 = vsel %vm1087, %v1097, %v1096
        %1099 = vst [vmem:[%s238] sm:$0x1] %v1098
        %s1100 = sand.u32 %s130, 1
        %s1101 = scalar_lea.sflag [#allocation3], %s1100
        %s1102 = sand.u32 %s130, 1
        %s1103 = scalar_lea.vmem [#allocation2], %s1102
        // Predicated region
        $region37: #{tpu_custom_call.1} parent=35 // pred_check
          %p1104 = pneg %p140
        $region38: #{tpu_custom_call.1} parent=35 // pred_check_branch
          %1106 = sbr.rel (%p1104) target = $region40
        $region39: #{tpu_custom_call.1} parent=35 // pred_region
          %1108 = vsyncadd %s1101, 0
          %s1109 = scalar_lea.hbm %s4, %s18
          %s1111 = sshll.u32 %s1103, 4
          %s1112 = int_to_ptr.vmem [resolvable:$true] %s1111
          %s1113 = sshll.u32 %s1109, 4
          %s1114 = int_to_ptr.hbm [resolvable:$true] %s1113
          %1116 = dma.vmem_to_hbm [thread:$0]  %s1112, 16, %s1114, %s1101
        $region40: #{tpu_custom_call.1} parent=35 // pred_fallthru
          _
      $region36: #{tpu_custom_call.1} parent=5 // pred_fallthru
        _
      %p1117 = scmp.le.s32.totalorder 2, %s13
      // Predicated region
      $region41: #{tpu_custom_call.1} parent=5 // pred_check
        %p1118 = pneg %p1117
      $region42: #{tpu_custom_call.1} parent=5 // pred_check_branch
        %1120 = sbr.rel (%p1118) target = $region44
      $region43: #{tpu_custom_call.1} parent=5 // pred_region
        %s1121 = ssub.s32 %s13, 2
        // Predicated region
        $region45: #{tpu_custom_call.1} parent=43 // pred_check
          %p1122 = pneg %p146
        $region46: #{tpu_custom_call.1} parent=43 // pred_check_branch
          %1124 = sbr.rel (%p1122) target = $region48
        $region47: #{tpu_custom_call.1} parent=43 // pred_region
          %s1125 = sand.u32 %s131, 1
          %s1126 = scalar_lea.sflag [#allocation3], %s1125
          %s1127 = sand.u32 %s131, 1
          %s1128 = scalar_lea.vmem [#allocation2], %s1127
          %1130 = dma.done %s1126, 16
        $region48: #{tpu_custom_call.1} parent=43 // pred_fallthru
          _
      $region44: #{tpu_custom_call.1} parent=5 // pred_fallthru
        _
    $region6: #{tpu_custom_call.1} parent=1 // loop_footer
      %s17 = sadd.s32 1, %s13
    $region7: #{tpu_custom_call.1} parent=1 // loop_footer_branch
      %12 = sbr.rel target = $region3
    $region8: #{tpu_custom_call.1} parent=1 // loop_exit
      _
    %1131 = vsyncpa [#allocation3], 1
    %s1132 = scalar_lea.sflag [#allocation3], 1
    %1133 = vsyncpa %s1132, 1

</llo_original>
